<compile_context>
chip_gen: v7x
topology: tpu7x:2x2x1
jax: 0.10.0
libtpu: 0.0.40
codegen_flags: <defaults>
</compile_context>

<pallas_src>
import numpy as np
import jax
import jax.numpy as jnp
from jax.experimental import pallas as pl
from jax.experimental.pallas import tpu as pltpu

OUT_LANES = 128  # fused output head width (lane-dense store)


def _mdn_kernel(x_ref, w0_ref, b0_ref, w1_ref, b1_ref,
                wout_ref, bout_ref, dmask_ref, amask_ref, out_ref):
    # trunk: input layer + one hidden layer (module default n_hidden_layers=1)
    h = jnp.tanh(
        jnp.dot(x_ref[...], w0_ref[...], preferred_element_type=jnp.float32)
        + b0_ref[...])
    h = jnp.tanh(
        jnp.dot(h, w1_ref[...], preferred_element_type=jnp.float32)
        + b1_ref[...])

    # fused output heads: [mu | U | alpha | zero-pad] in one 128-lane slab
    fused = (jnp.dot(h, wout_ref[...], preferred_element_type=jnp.float32)
             + bout_ref[...])

    dmask = dmask_ref[...] > 0.5   # Cholesky-diagonal columns
    amask = amask_ref[...] > 0.5   # alpha (mixture weight) columns

    # exp on the Cholesky diagonal entries
    out = jnp.where(dmask, jnp.exp(fused), fused)

    # masked softmax over the alpha columns (torch Softmax(dim=1))
    logits = jnp.where(amask, fused, jnp.float32(-1e30))
    m = jnp.max(logits, axis=1, keepdims=True)
    e = jnp.where(amask, jnp.exp(logits - m), jnp.float32(0.0))
    denom = jnp.sum(e, axis=1, keepdims=True)
    alpha = e * pl.reciprocal(denom, approx=False)

    # single unmasked, lane-dense (TB, 128) store
    out_ref[...] = jnp.where(amask, alpha, out)


def init_params(key, ndim_input=3, ndim_output=2, n_hidden_units=10,
                n_components=3):
    """Deterministic synthetic parameters (shapes match the torch module)."""
    n_triu = ndim_output * (ndim_output - 1) // 2 + ndim_output
    keys = jax.random.split(key, 10)
    scale = 0.5

    def lin(kw, kb, fan_in, fan_out):
        w = scale * jax.random.normal(kw, (fan_in, fan_out), jnp.float32)
        b = scale * jax.random.normal(kb, (1, fan_out), jnp.float32)
        return w, b

    w0, b0 = lin(keys[0], keys[1], ndim_input, n_hidden_units)
    w1, b1 = lin(keys[2], keys[3], n_hidden_units, n_hidden_units)
    wmu, bmu = lin(keys[4], keys[5], n_hidden_units, ndim_output * n_components)
    wu, bu = lin(keys[6], keys[7], n_hidden_units, n_triu * n_components)
    wa, ba = lin(keys[8], keys[9], n_hidden_units, n_components)
    return dict(w0=w0, b0=b0, w1=w1, b1=b1, wmu=wmu, bmu=bmu,
                wu=wu, bu=bu, wa=wa, ba=ba)


def multivariate_mog_mdn_forward(x, params, ndim_output=2, n_components=3,
                                 block_b=1024):
    """Forward pass; block_b is the batch tile (multiple of 8, sweepable)."""
    B, ndim_in = x.shape
    ndims = ndim_output
    n_triu = ndims * (ndims - 1) // 2 + ndims
    n_hidden = params["w0"].shape[1]

    n_mu = ndims * n_components
    n_u = n_triu * n_components
    n_heads = n_mu + n_u + n_components
    assert n_heads <= OUT_LANES

    # ---- pack the three heads into one zero-padded 128-lane weight / bias ----
    w_out = jnp.zeros((n_hidden, OUT_LANES), jnp.float32)
    w_out = w_out.at[:, :n_mu].set(params["wmu"])
    w_out = w_out.at[:, n_mu:n_mu + n_u].set(params["wu"])
    w_out = w_out.at[:, n_mu + n_u:n_heads].set(params["wa"])
    b_out = jnp.zeros((1, OUT_LANES), jnp.float32)
    b_out = b_out.at[:, :n_mu].set(params["bmu"])
    b_out = b_out.at[:, n_mu:n_mu + n_u].set(params["bu"])
    b_out = b_out.at[:, n_mu + n_u:n_heads].set(params["ba"])

    # ---- trace-time constant masks (no in-kernel iota / modulo) ----
    diag_local = [i * ndims - (i * (i - 1)) // 2 for i in range(ndims)]
    dmask_np = np.zeros((1, OUT_LANES), np.float32)
    for c in range(n_components):
        for p in diag_local:
            dmask_np[0, n_mu + c * n_triu + p] = 1.0
    amask_np = np.zeros((1, OUT_LANES), np.float32)
    amask_np[0, n_mu + n_u:n_heads] = 1.0
    dmask = jnp.asarray(dmask_np)
    amask = jnp.asarray(amask_np)

    # ---- batch tiling: TB multiple of 8, pad B up to a multiple of TB ----
    tb = int(min(block_b, ((B + 7) // 8) * 8))
    b_pad = ((B + tb - 1) // tb) * tb
    x_p = x if b_pad == B else jnp.pad(x, ((0, b_pad - B), (0, 0)))

    batch_spec = lambda feat: pl.BlockSpec((tb, feat), lambda i: (i, 0))
    const_spec = lambda shape: pl.BlockSpec(shape, lambda i: (0, 0))

    out = pl.pallas_call(
        _mdn_kernel,
        grid=(b_pad // tb,),
        in_specs=[
            batch_spec(ndim_in),
            const_spec(params["w0"].shape),
            const_spec(params["b0"].shape),
            const_spec(params["w1"].shape),
            const_spec(params["b1"].shape),
            const_spec((n_hidden, OUT_LANES)),
            const_spec((1, OUT_LANES)),
            const_spec((1, OUT_LANES)),
            const_spec((1, OUT_LANES)),
        ],
        out_specs=batch_spec(OUT_LANES),
        out_shape=jax.ShapeDtypeStruct((b_pad, OUT_LANES), jnp.float32),
        compiler_params=pltpu.CompilerParams(
            dimension_semantics=("parallel",)),
    )(x_p, params["w0"], params["b0"], params["w1"], params["b1"],
      w_out, b_out, dmask, amask)

    # ---- slice the fused slab back into the three heads ----
    mu_flat = out[:B, :n_mu]
    uvec = out[:B, n_mu:n_mu + n_u]
    alpha = out[:B, n_mu + n_u:n_heads]

    out_mu = mu_flat.reshape(B, ndims, n_components)

    # glue: scatter U_vec (diag already exponentiated in-kernel) into the
    # upper-triangular (B, n_components, ndims, ndims) matrix, rest zeros.
    i1, i2 = np.triu_indices(ndims)
    U_mat = jnp.zeros((B, n_components, ndims, ndims), jnp.float32)
    U_mat = U_mat.at[:, :, i1, i2].set(uvec.reshape(B, n_components, n_triu))

    return out_mu, U_mat, alpha


def _reference_forward(x, params, ndim_output=2, n_components=3):
    """Plain-JAX reference mirroring the torch forward (for verification)."""
    B = x.shape[0]
    ndims = ndim_output
    n_triu = ndims * (ndims - 1) // 2 + ndims
    h = jnp.tanh(x @ params["w0"] + params["b0"])
    h = jnp.tanh(h @ params["w1"] + params["b1"])
    out_mu = (h @ params["wmu"] + params["bmu"]).reshape(B, ndims, n_components)
    alpha = jax.nn.softmax(h @ params["wa"] + params["ba"], axis=1)
    uvec = (h @ params["wu"] + params["bu"]).reshape(B, n_components, n_triu)
    i1, i2 = np.triu_indices(ndims)
    U = jnp.zeros((B, n_components, ndims, ndims), jnp.float32)
    U = U.at[:, :, i1, i2].set(uvec)
    d = np.arange(ndims)
    U = U.at[:, :, d, d].set(jnp.exp(U[:, :, d, d]))
    return out_mu, U, alpha


if __name__ == "__main__":
    # module defaults: ndim_input=3, ndim_output=2, n_hidden_units=10,
    # n_hidden_layers=1, n_components=3
    key = jax.random.PRNGKey(0)
    key_x, key_p = jax.random.split(key)

    batch = 20          # deliberately not a multiple of the tile -> exercises padding
    ndim_input = 3
    x = jax.random.normal(key_x, (batch, ndim_input), jnp.float32)
    params = init_params(key_p)

    # small tile so the demo exercises a multi-step pipelined grid
    out_mu, U_mat, alpha = multivariate_mog_mdn_forward(x, params, block_b=8)
    jax.block_until_ready((out_mu, U_mat, alpha))

    # sanity check against a plain-JAX reference of the torch semantics
    ref_mu, ref_U, ref_alpha = _reference_forward(x, params)
    assert out_mu.shape == (batch, 2, 3)
    assert U_mat.shape == (batch, 3, 2, 2)
    assert alpha.shape == (batch, 3)
    np.testing.assert_allclose(np.asarray(out_mu), np.asarray(ref_mu),
                               rtol=1e-5, atol=1e-5)
    np.testing.assert_allclose(np.asarray(U_mat), np.asarray(ref_U),
                               rtol=1e-5, atol=1e-5)
    np.testing.assert_allclose(np.asarray(alpha), np.asarray(ref_alpha),
                               rtol=1e-5, atol=1e-5)

    print("KERNEL_OK")
</pallas_src>

<mosaic_0001>
module attributes {stable_mosaic.version = 11 : i64} {
  func.func @_mdn_kernel(%arg0: i32, %arg1: memref<8x3xf32, #tpu.memory_space<vmem>>, %arg2: memref<3x10xf32, #tpu.memory_space<vmem>>, %arg3: memref<1x10xf32, #tpu.memory_space<vmem>>, %arg4: memref<10x10xf32, #tpu.memory_space<vmem>>, %arg5: memref<1x10xf32, #tpu.memory_space<vmem>>, %arg6: memref<10x128xf32, #tpu.memory_space<vmem>>, %arg7: memref<1x128xf32, #tpu.memory_space<vmem>>, %arg8: memref<1x128xf32, #tpu.memory_space<vmem>>, %arg9: memref<1x128xf32, #tpu.memory_space<vmem>>, %arg10: memref<8x128xf32, #tpu.memory_space<vmem>>) attributes {dimension_semantics = [#tpu.dimension_semantics<parallel>], iteration_bounds = array<i64: 3>, scalar_prefetch = 0 : i64, scratch_operands = 0 : i64, tpu.core_type = #tpu.core_type<tc>, window_params = [{transform_indices = @transform_0, window_bounds = array<i64: 8, 3>}, {pipeline_mode = #tpu.pipeline_mode<synchronous>, transform_indices = @transform_1, window_bounds = array<i64: 3, 10>}, {pipeline_mode = #tpu.pipeline_mode<synchronous>, transform_indices = @transform_2, window_bounds = array<i64: 1, 10>}, {pipeline_mode = #tpu.pipeline_mode<synchronous>, transform_indices = @transform_3, window_bounds = array<i64: 10, 10>}, {pipeline_mode = #tpu.pipeline_mode<synchronous>, transform_indices = @transform_4, window_bounds = array<i64: 1, 10>}, {pipeline_mode = #tpu.pipeline_mode<synchronous>, transform_indices = @transform_5, window_bounds = array<i64: 10, 128>}, {pipeline_mode = #tpu.pipeline_mode<synchronous>, transform_indices = @transform_6, window_bounds = array<i64: 1, 128>}, {pipeline_mode = #tpu.pipeline_mode<synchronous>, transform_indices = @transform_7, window_bounds = array<i64: 1, 128>}, {pipeline_mode = #tpu.pipeline_mode<synchronous>, transform_indices = @transform_8, window_bounds = array<i64: 1, 128>}, {transform_indices = @transform_9, window_bounds = array<i64: 8, 128>}]} {
    %c0 = arith.constant 0 : index
    %c0_0 = arith.constant 0 : index
    %0 = vector.load %arg1[%c0, %c0_0] : memref<8x3xf32, #tpu.memory_space<vmem>>, vector<8x3xf32>
    %c0_1 = arith.constant 0 : index
    %c0_2 = arith.constant 0 : index
    %1 = vector.load %arg2[%c0_1, %c0_2] : memref<3x10xf32, #tpu.memory_space<vmem>>, vector<3x10xf32>
    %cst = arith.constant dense<0.000000e+00> : vector<8x10xf32>
    %2 = tpu.matmul %0, %1, %cst {dimension_numbers = #tpu.dot_dimension_numbers<[1], [0], [0], [1], [0, 0, 1, 1], [], []>} : vector<8x3xf32>, vector<3x10xf32>, vector<8x10xf32> -> vector<8x10xf32>
    %c0_3 = arith.constant 0 : index
    %c0_4 = arith.constant 0 : index
    %3 = vector.load %arg3[%c0_3, %c0_4] : memref<1x10xf32, #tpu.memory_space<vmem>>, vector<1x10xf32>
    %4 = vector.broadcast %3 : vector<1x10xf32> to vector<8x10xf32>
    %5 = arith.addf %2, %4 : vector<8x10xf32>
    %6 = math.tanh %5 : vector<8x10xf32>
    %c0_5 = arith.constant 0 : index
    %c0_6 = arith.constant 0 : index
    %7 = vector.load %arg4[%c0_5, %c0_6] : memref<10x10xf32, #tpu.memory_space<vmem>>, vector<10x10xf32>
    %cst_7 = arith.constant dense<0.000000e+00> : vector<8x10xf32>
    %8 = tpu.matmul %6, %7, %cst_7 {dimension_numbers = #tpu.dot_dimension_numbers<[1], [0], [0], [1], [0, 0, 1, 1], [], []>} : vector<8x10xf32>, vector<10x10xf32>, vector<8x10xf32> -> vector<8x10xf32>
    %c0_8 = arith.constant 0 : index
    %c0_9 = arith.constant 0 : index
    %9 = vector.load %arg5[%c0_8, %c0_9] : memref<1x10xf32, #tpu.memory_space<vmem>>, vector<1x10xf32>
    %10 = vector.broadcast %9 : vector<1x10xf32> to vector<8x10xf32>
    %11 = arith.addf %8, %10 : vector<8x10xf32>
    %12 = math.tanh %11 : vector<8x10xf32>
    %c0_10 = arith.constant 0 : index
    %c0_11 = arith.constant 0 : index
    %13 = vector.load %arg6[%c0_10, %c0_11] : memref<10x128xf32, #tpu.memory_space<vmem>>, vector<10x128xf32>
    %cst_12 = arith.constant dense<0.000000e+00> : vector<8x128xf32>
    %14 = tpu.matmul %12, %13, %cst_12 {dimension_numbers = #tpu.dot_dimension_numbers<[1], [0], [0], [1], [0, 0, 1, 1], [], []>} : vector<8x10xf32>, vector<10x128xf32>, vector<8x128xf32> -> vector<8x128xf32>
    %c0_13 = arith.constant 0 : index
    %c0_14 = arith.constant 0 : index
    %15 = vector.load %arg7[%c0_13, %c0_14] : memref<1x128xf32, #tpu.memory_space<vmem>>, vector<1x128xf32>
    %16 = vector.broadcast %15 : vector<1x128xf32> to vector<8x128xf32>
    %17 = arith.addf %14, %16 : vector<8x128xf32>
    %c0_15 = arith.constant 0 : index
    %c0_16 = arith.constant 0 : index
    %18 = vector.load %arg8[%c0_15, %c0_16] : memref<1x128xf32, #tpu.memory_space<vmem>>, vector<1x128xf32>
    %cst_17 = arith.constant 5.000000e-01 : f32
    %19 = vector.broadcast %cst_17 : f32 to vector<1x128xf32>
    %20 = arith.cmpf ogt, %18, %19 : vector<1x128xf32>
    %c0_18 = arith.constant 0 : index
    %c0_19 = arith.constant 0 : index
    %21 = vector.load %arg9[%c0_18, %c0_19] : memref<1x128xf32, #tpu.memory_space<vmem>>, vector<1x128xf32>
    %cst_20 = arith.constant 5.000000e-01 : f32
    %22 = vector.broadcast %cst_20 : f32 to vector<1x128xf32>
    %23 = arith.cmpf ogt, %21, %22 : vector<1x128xf32>
    %24 = math.exp %17 : vector<8x128xf32>
    %25 = vector.shape_cast %20 : vector<1x128xi1> to vector<1x128xi1>
    %26 = vector.broadcast %25 : vector<1x128xi1> to vector<8x128xi1>
    %27 = arith.select %26, %24, %17 : vector<8x128xi1>, vector<8x128xf32>
    %cst_21 = arith.constant -1.000000e+30 : f32
    %28 = vector.shape_cast %23 : vector<1x128xi1> to vector<1x128xi1>
    %29 = vector.broadcast %28 : vector<1x128xi1> to vector<8x128xi1>
    %30 = vector.broadcast %cst_21 : f32 to vector<8x128xf32>
    %31 = arith.select %29, %17, %30 : vector<8x128xi1>, vector<8x128xf32>
    %cst_22 = arith.constant dense<0xFF800000> : vector<8xf32>
    %32 = vector.multi_reduction <maximumf>, %31, %cst_22 [1] : vector<8x128xf32> to vector<8xf32>
    %33 = vector.shape_cast %32 : vector<8xf32> to vector<8x1xf32>
    %34 = vector.broadcast %33 : vector<8x1xf32> to vector<8x128xf32>
    %35 = arith.subf %31, %34 : vector<8x128xf32>
    %36 = math.exp %35 : vector<8x128xf32>
    %cst_23 = arith.constant 0.000000e+00 : f32
    %37 = vector.shape_cast %23 : vector<1x128xi1> to vector<1x128xi1>
    %38 = vector.broadcast %37 : vector<1x128xi1> to vector<8x128xi1>
    %39 = vector.broadcast %cst_23 : f32 to vector<8x128xf32>
    %40 = arith.select %38, %36, %39 : vector<8x128xi1>, vector<8x128xf32>
    %cst_24 = arith.constant dense<0.000000e+00> : vector<8xf32>
    %41 = vector.multi_reduction <add>, %40, %cst_24 [1] : vector<8x128xf32> to vector<8xf32>
    %42 = vector.shape_cast %41 : vector<8xf32> to vector<8x1xf32>
    %43 = tpu.reciprocal %42 : vector<8x1xf32> -> vector<8x1xf32>
    %44 = vector.broadcast %43 : vector<8x1xf32> to vector<8x128xf32>
    %45 = arith.mulf %40, %44 : vector<8x128xf32>
    %46 = vector.shape_cast %23 : vector<1x128xi1> to vector<1x128xi1>
    %47 = vector.broadcast %46 : vector<1x128xi1> to vector<8x128xi1>
    %48 = arith.select %47, %45, %27 : vector<8x128xi1>, vector<8x128xf32>
    %c0_25 = arith.constant 0 : index
    %c0_26 = arith.constant 0 : index
    %49 = vector.load %arg10[%c0_25, %c0_26] : memref<8x128xf32, #tpu.memory_space<vmem>>, vector<8x128xf32>
    tpu.vector_store %arg10[%c0_25, %c0_26], %48 {strides = array<i32>} : memref<8x128xf32, #tpu.memory_space<vmem>>, vector<8x128xf32>,
    return
  }
  func.func @transform_0(%arg0: i32) -> (i32, i32) {
    %c0_i32 = arith.constant 0 : i32
    %c0_i32_0 = arith.constant 0 : i32
    return %arg0, %c0_i32 : i32, i32
  }
  func.func @transform_1(%arg0: i32) -> (i32, i32) {
    %c0_i32 = arith.constant 0 : i32
    %c0_i32_0 = arith.constant 0 : i32
    %c0_i32_1 = arith.constant 0 : i32
    return %c0_i32, %c0_i32_0 : i32, i32
  }
  func.func @transform_2(%arg0: i32) -> (i32, i32) {
    %c0_i32 = arith.constant 0 : i32
    %c0_i32_0 = arith.constant 0 : i32
    %c0_i32_1 = arith.constant 0 : i32
    return %c0_i32, %c0_i32_0 : i32, i32
  }
  func.func @transform_3(%arg0: i32) -> (i32, i32) {
    %c0_i32 = arith.constant 0 : i32
    %c0_i32_0 = arith.constant 0 : i32
    %c0_i32_1 = arith.constant 0 : i32
    return %c0_i32, %c0_i32_0 : i32, i32
  }
  func.func @transform_4(%arg0: i32) -> (i32, i32) {
    %c0_i32 = arith.constant 0 : i32
    %c0_i32_0 = arith.constant 0 : i32
    %c0_i32_1 = arith.constant 0 : i32
    return %c0_i32, %c0_i32_0 : i32, i32
  }
  func.func @transform_5(%arg0: i32) -> (i32, i32) {
    %c0_i32 = arith.constant 0 : i32
    %c0_i32_0 = arith.constant 0 : i32
    %c0_i32_1 = arith.constant 0 : i32
    return %c0_i32, %c0_i32_0 : i32, i32
  }
  func.func @transform_6(%arg0: i32) -> (i32, i32) {
    %c0_i32 = arith.constant 0 : i32
    %c0_i32_0 = arith.constant 0 : i32
    %c0_i32_1 = arith.constant 0 : i32
    return %c0_i32, %c0_i32_0 : i32, i32
  }
  func.func @transform_7(%arg0: i32) -> (i32, i32) {
    %c0_i32 = arith.constant 0 : i32
    %c0_i32_0 = arith.constant 0 : i32
    %c0_i32_1 = arith.constant 0 : i32
    return %c0_i32, %c0_i32_0 : i32, i32
  }
  func.func @transform_8(%arg0: i32) -> (i32, i32) {
    %c0_i32 = arith.constant 0 : i32
    %c0_i32_0 = arith.constant 0 : i32
    %c0_i32_1 = arith.constant 0 : i32
    return %c0_i32, %c0_i32_0 : i32, i32
  }
  func.func @transform_9(%arg0: i32) -> (i32, i32) {
    %c0_i32 = arith.constant 0 : i32
    %c0_i32_0 = arith.constant 0 : i32
    return %arg0, %c0_i32 : i32, i32
  }
}

</mosaic_0001>

<llo_original>
// kernel: tpu_custom_call.1
$region0: #{tpu_custom_call.1}
  #allocation0 [shape = 'u32[]', space=smem, size = 0x4, offset = 0x4, fixed_abs, tag = 'smem constant byte address 0x4 - core index']
  #allocation1 [shape = 'u32[144,128]{1,0:T(1,128)}', space=vmem, size = 0x12000, scoped, tag = 'internal scratch']
  %s0 = inlined_call_operand.vmem [shape: f32[24,3], index: 0, kind: input, shape index: {}]
  %s1 = inlined_call_operand.hbm [shape: f32[3,10], index: 1, kind: input, shape index: {}]
  %s2 = inlined_call_operand.vmem [shape: f32[1,10], index: 2, kind: input, shape index: {}]
  %s3 = inlined_call_operand.vmem [shape: f32[10,10], index: 3, kind: input, shape index: {}]
  %s4 = inlined_call_operand.vmem [shape: f32[1,10], index: 4, kind: input, shape index: {}]
  %s5 = inlined_call_operand.vmem [shape: f32[10,128], index: 5, kind: input, shape index: {}]
  %s6 = inlined_call_operand.vmem [shape: f32[1,128], index: 6, kind: input, shape index: {}]
  %s7 = inlined_call_operand.vmem [shape: f32[1,128], index: 7, kind: input, shape index: {}]
  %s8 = inlined_call_operand.vmem [shape: f32[1,128], index: 8, kind: input, shape index: {}]
  %s9 = inlined_call_operand.hbm [shape: f32[24,128], index: 9, kind: output, shape index: {}]
  %s10 = sld [smem:[#allocation0]]
  $region73: #{tpu_custom_call.1} parent=0
    _
  %s12 = ssub.s32 1, %s10
  %s13 = scalar_select 0, %s12, %s10
  $region1: #{tpu_custom_call.1} parent=0
    #allocation2 [shape = 'u8[2048]{0}', space=vmem, size = 0x800, scoped, tag = 'input window, operand 1, single buffered']
    #allocation3 [shape = 's32[2]{0}', space=sflag, size = 0x8, scoped, tag = 'scoped memory for tpu_custom_call.1']
    #allocation4 [shape = 's32[2]{0}', space=sflag, size = 0x8, scoped, tag = 'scoped memory for tpu_custom_call.1']
    #allocation5 [shape = 'u8[8192]{0}', space=vmem, size = 0x2000, scoped, tag = 'output window, operand 0']
    %14 = vsyncpa [#allocation3], 0
    %15 = vsyncpa [#allocation4], 0
    %s16 = scalar_lea.sflag [#allocation4], 1
    %17 = vsyncpa %s16, 0
    loop: start=0, step=1, limit=5
    $region2: #{tpu_custom_call.1} parent=1 // loop_pre_header
      _
    $region3: #{tpu_custom_call.1} parent=1 // loop_header
      %s19 = sphi 0, %s23
      %p20 = scmp.ge.s32.totalorder %s19, 5
      %s29 = sphi 0, %s31
      %s32 = sphi 0, %s29
      %s33 = sphi 0, %s32
      %s49 = sphi 0, %s33
      %s53 = sphi 0, %s53
      %s55 = sphi 0, %s53
      %s56 = sphi 0, %s55
      %s70 = sphi 0, %s56
      %s74 = sphi 0, %s74
      %s76 = sphi 0, %s74
      %s77 = sphi 0, %s76
      %s91 = sphi 0, %s77
      %s95 = sphi 0, %s95
      %s97 = sphi 0, %s95
      %s98 = sphi 0, %s97
      %s112 = sphi 0, %s98
      %s116 = sphi 0, %s116
      %s118 = sphi 0, %s116
      %s119 = sphi 0, %s118
      %s133 = sphi 0, %s119
      %s137 = sphi 0, %s137
      %s139 = sphi 0, %s137
      %s140 = sphi 0, %s139
      %s154 = sphi 0, %s140
      %s158 = sphi 0, %s158
      %s160 = sphi 0, %s158
      %s161 = sphi 0, %s160
      %s175 = sphi 0, %s161
      %s179 = sphi 0, %s179
      %s181 = sphi 0, %s179
      %s182 = sphi 0, %s181
      %s196 = sphi 0, %s182
      %s200 = sphi 0, %s200
      %s202 = sphi 0, %s200
      %s203 = sphi 0, %s202
      %s217 = sphi 0, %s203
      %s223 = sphi 0, %s225
      %s226 = sphi 0, %s223
      %s227 = sphi 0, %s226
      %s243 = sphi 0, %s227
    $region4: #{tpu_custom_call.1} parent=1 // loop_header_branch
      %22 = sbr.rel (%p20) target = $region8
    $region5: #{tpu_custom_call.1} parent=1 // loop_body
      %s24 = ssub.s32 %s19, 1
      %s25 = ssub.s32 %s19, 2
      %s26 = sadd.s32 %s19, 1
      %s27 = ssub.s32 %s19, %s26
      %p28 = scmp.eq.s32.totalorder %s27, 0
      %s30 = sadd.s32 %s29, 1
      %s31 = scalar_select %p28, %s29, %s30
      %p34 = pneg %p28
      %p35 = scmp.eq.s32.totalorder %s19, 2
      %p36 = por %p34, %p35
      %p37 = scmp.ne.s32.totalorder %s29, %s32
      %p38 = scmp.eq.s32.totalorder %s19, 0
      %p39 = por %p37, %p38
      %p40 = scmp.ne.s32.totalorder %s29, %s32
      %p41 = scmp.eq.s32.totalorder %s24, 2
      %p42 = por %p40, %p41
      %p43 = scmp.ne.s32.totalorder %s32, %s33
      %p44 = scmp.eq.s32.totalorder %s24, 0
      %p45 = por %p43, %p44
      %p46 = scmp.ne.s32.totalorder %s32, %s33
      %p47 = scmp.eq.s32.totalorder %s25, 2
      %p48 = por %p46, %p47
      %p50 = scmp.ne.s32.totalorder %s33, %s49
      %p51 = scmp.eq.s32.totalorder %s25, 0
      %p52 = por %p50, %p51
      %s54 = sadd.s32 %s53, 1
      %p57 = scmp.eq.s32.totalorder %s19, 2
      %p58 = scmp.ne.s32.totalorder %s53, %s55
      %p59 = scmp.eq.s32.totalorder %s19, 0
      %p60 = por %p58, %p59
      %p61 = scmp.ne.s32.totalorder %s53, %s55
      %p62 = scmp.eq.s32.totalorder %s24, 2
      %p63 = por %p61, %p62
      %p64 = scmp.ne.s32.totalorder %s55, %s56
      %p65 = scmp.eq.s32.totalorder %s24, 0
      %p66 = por %p64, %p65
      %p67 = scmp.ne.s32.totalorder %s55, %s56
      %p68 = scmp.eq.s32.totalorder %s25, 2
      %p69 = por %p67, %p68
      %p71 = scmp.ne.s32.totalorder %s56, %s70
      %p72 = scmp.eq.s32.totalorder %s25, 0
      %p73 = por %p71, %p72
      %s75 = sadd.s32 %s74, 1
      %p78 = scmp.eq.s32.totalorder %s19, 2
      %p79 = scmp.ne.s32.totalorder %s74, %s76
      %p80 = scmp.eq.s32.totalorder %s19, 0
      %p81 = por %p79, %p80
      %p82 = scmp.ne.s32.totalorder %s74, %s76
      %p83 = scmp.eq.s32.totalorder %s24, 2
      %p84 = por %p82, %p83
      %p85 = scmp.ne.s32.totalorder %s76, %s77
      %p86 = scmp.eq.s32.totalorder %s24, 0
      %p87 = por %p85, %p86
      %p88 = scmp.ne.s32.totalorder %s76, %s77
      %p89 = scmp.eq.s32.totalorder %s25, 2
      %p90 = por %p88, %p89
      %p92 = scmp.ne.s32.totalorder %s77, %s91
      %p93 = scmp.eq.s32.totalorder %s25, 0
      %p94 = por %p92, %p93
      %s96 = sadd.s32 %s95, 1
      %p99 = scmp.eq.s32.totalorder %s19, 2
      %p100 = scmp.ne.s32.totalorder %s95, %s97
      %p101 = scmp.eq.s32.totalorder %s19, 0
      %p102 = por %p100, %p101
      %p103 = scmp.ne.s32.totalorder %s95, %s97
      %p104 = scmp.eq.s32.totalorder %s24, 2
      %p105 = por %p103, %p104
      %p106 = scmp.ne.s32.totalorder %s97, %s98
      %p107 = scmp.eq.s32.totalorder %s24, 0
      %p108 = por %p106, %p107
      %p109 = scmp.ne.s32.totalorder %s97, %s98
      %p110 = scmp.eq.s32.totalorder %s25, 2
      %p111 = por %p109, %p110
      %p113 = scmp.ne.s32.totalorder %s98, %s112
      %p114 = scmp.eq.s32.totalorder %s25, 0
      %p115 = por %p113, %p114
      %s117 = sadd.s32 %s116, 1
      %p120 = scmp.eq.s32.totalorder %s19, 2
      %p121 = scmp.ne.s32.totalorder %s116, %s118
      %p122 = scmp.eq.s32.totalorder %s19, 0
      %p123 = por %p121, %p122
      %p124 = scmp.ne.s32.totalorder %s116, %s118
      %p125 = scmp.eq.s32.totalorder %s24, 2
      %p126 = por %p124, %p125
      %p127 = scmp.ne.s32.totalorder %s118, %s119
      %p128 = scmp.eq.s32.totalorder %s24, 0
      %p129 = por %p127, %p128
      %p130 = scmp.ne.s32.totalorder %s118, %s119
      %p131 = scmp.eq.s32.totalorder %s25, 2
      %p132 = por %p130, %p131
      %p134 = scmp.ne.s32.totalorder %s119, %s133
      %p135 = scmp.eq.s32.totalorder %s25, 0
      %p136 = por %p134, %p135
      %s138 = sadd.s32 %s137, 1
      %p141 = scmp.eq.s32.totalorder %s19, 2
      %p142 = scmp.ne.s32.totalorder %s137, %s139
      %p143 = scmp.eq.s32.totalorder %s19, 0
      %p144 = por %p142, %p143
      %p145 = scmp.ne.s32.totalorder %s137, %s139
      %p146 = scmp.eq.s32.totalorder %s24, 2
      %p147 = por %p145, %p146
      %p148 = scmp.ne.s32.totalorder %s139, %s140
      %p149 = scmp.eq.s32.totalorder %s24, 0
      %p150 = por %p148, %p149
      %p151 = scmp.ne.s32.totalorder %s139, %s140
      %p152 = scmp.eq.s32.totalorder %s25, 2
      %p153 = por %p151, %p152
      %p155 = scmp.ne.s32.totalorder %s140, %s154
      %p156 = scmp.eq.s32.totalorder %s25, 0
      %p157 = por %p155, %p156
      %s159 = sadd.s32 %s158, 1
      %p162 = scmp.eq.s32.totalorder %s19, 2
      %p163 = scmp.ne.s32.totalorder %s158, %s160
      %p164 = scmp.eq.s32.totalorder %s19, 0
      %p165 = por %p163, %p164
      %p166 = scmp.ne.s32.totalorder %s158, %s160
      %p167 = scmp.eq.s32.totalorder %s24, 2
      %p168 = por %p166, %p167
      %p169 = scmp.ne.s32.totalorder %s160, %s161
      %p170 = scmp.eq.s32.totalorder %s24, 0
      %p171 = por %p169, %p170
      %p172 = scmp.ne.s32.totalorder %s160, %s161
      %p173 = scmp.eq.s32.totalorder %s25, 2
      %p174 = por %p172, %p173
      %p176 = scmp.ne.s32.totalorder %s161, %s175
      %p177 = scmp.eq.s32.totalorder %s25, 0
      %p178 = por %p176, %p177
      %s180 = sadd.s32 %s179, 1
      %p183 = scmp.eq.s32.totalorder %s19, 2
      %p184 = scmp.ne.s32.totalorder %s179, %s181
      %p185 = scmp.eq.s32.totalorder %s19, 0
      %p186 = por %p184, %p185
      %p187 = scmp.ne.s32.totalorder %s179, %s181
      %p188 = scmp.eq.s32.totalorder %s24, 2
      %p189 = por %p187, %p188
      %p190 = scmp.ne.s32.totalorder %s181, %s182
      %p191 = scmp.eq.s32.totalorder %s24, 0
      %p192 = por %p190, %p191
      %p193 = scmp.ne.s32.totalorder %s181, %s182
      %p194 = scmp.eq.s32.totalorder %s25, 2
      %p195 = por %p193, %p194
      %p197 = scmp.ne.s32.totalorder %s182, %s196
      %p198 = scmp.eq.s32.totalorder %s25, 0
      %p199 = por %p197, %p198
      %s201 = sadd.s32 %s200, 1
      %p204 = scmp.eq.s32.totalorder %s19, 2
      %p205 = scmp.ne.s32.totalorder %s200, %s202
      %p206 = scmp.eq.s32.totalorder %s19, 0
      %p207 = por %p205, %p206
      %p208 = scmp.ne.s32.totalorder %s200, %s202
      %p209 = scmp.eq.s32.totalorder %s24, 2
      %p210 = por %p208, %p209
      %p211 = scmp.ne.s32.totalorder %s202, %s203
      %p212 = scmp.eq.s32.totalorder %s24, 0
      %p213 = por %p211, %p212
      %p214 = scmp.ne.s32.totalorder %s202, %s203
      %p215 = scmp.eq.s32.totalorder %s25, 2
      %p216 = por %p214, %p215
      %p218 = scmp.ne.s32.totalorder %s203, %s217
      %p219 = scmp.eq.s32.totalorder %s25, 0
      %p220 = por %p218, %p219
      %s221 = ssub.s32 %s19, %s26
      %p222 = scmp.eq.s32.totalorder %s221, 0
      %s224 = sadd.s32 %s223, 1
      %s225 = scalar_select %p222, %s223, %s224
      %p228 = pneg %p222
      %p229 = scmp.eq.s32.totalorder %s19, 2
      %p230 = por %p228, %p229
      %p231 = scmp.ne.s32.totalorder %s223, %s226
      %p232 = scmp.eq.s32.totalorder %s19, 0
      %p233 = por %p231, %p232
      %p234 = scmp.ne.s32.totalorder %s223, %s226
      %p235 = scmp.eq.s32.totalorder %s24, 2
      %p236 = por %p234, %p235
      %p237 = scmp.ne.s32.totalorder %s226, %s227
      %p238 = scmp.eq.s32.totalorder %s24, 0
      %p239 = por %p237, %p238
      %p240 = scmp.ne.s32.totalorder %s226, %s227
      %p241 = scmp.eq.s32.totalorder %s25, 2
      %p242 = por %p240, %p241
      %p244 = scmp.ne.s32.totalorder %s227, %s243
      %p245 = scmp.eq.s32.totalorder %s25, 0
      %p246 = por %p244, %p245
      %p247 = scmp.le.s32.totalorder 1, %s19
      %p248 = scmp.lt.s32.totalorder %s19, 4
      %p249 = pnand %p247, %p248
      %p250 = pneg %p249
      // Predicated region
      $region9: #{tpu_custom_call.1} parent=5 // pred_check
        _
      $region10: #{tpu_custom_call.1} parent=5 // pred_check_branch
        %252 = sbr.rel (%p249) target = $region12
      $region11: #{tpu_custom_call.1} parent=5 // pred_region
        %s253 = ssub.s32 %s19, 1
        // Predicated region
        $region13: #{tpu_custom_call.1} parent=11 // pred_check
          %p254 = pneg %p66
        $region14: #{tpu_custom_call.1} parent=11 // pred_check_branch
          %256 = sbr.rel (%p254) target = $region16
        $region15: #{tpu_custom_call.1} parent=11 // pred_region
          %s258 = ssub.s32 64, 64
          %259 = vsyncadd [#allocation3], %s258
          %s261 = sshll.u32 [#allocation2], 4
          %s262 = int_to_ptr.vmem [resolvable:$true] %s261
          %264 = dma.hbm_to_vmem [thread:$0]  %s1, 64, %s262, [#allocation3]
        $region16: #{tpu_custom_call.1} parent=11 // pred_fallthru
          _
        // Predicated region
        $region17: #{tpu_custom_call.1} parent=11 // pred_check
          %p265 = pneg %p87
        $region18: #{tpu_custom_call.1} parent=11 // pred_check_branch
          %267 = sbr.rel (%p265) target = $region20
        $region19: #{tpu_custom_call.1} parent=11 // pred_region
          _
        $region20: #{tpu_custom_call.1} parent=11 // pred_fallthru
          _
        // Predicated region
        $region21: #{tpu_custom_call.1} parent=11 // pred_check
          %p268 = pneg %p108
        $region22: #{tpu_custom_call.1} parent=11 // pred_check_branch
          %270 = sbr.rel (%p268) target = $region24
        $region23: #{tpu_custom_call.1} parent=11 // pred_region
          _
        $region24: #{tpu_custom_call.1} parent=11 // pred_fallthru
          _
        // Predicated region
        $region25: #{tpu_custom_call.1} parent=11 // pred_check
          %p271 = pneg %p129
        $region26: #{tpu_custom_call.1} parent=11 // pred_check_branch
          %273 = sbr.rel (%p271) target = $region28
        $region27: #{tpu_custom_call.1} parent=11 // pred_region
          _
        $region28: #{tpu_custom_call.1} parent=11 // pred_fallthru
          _
        // Predicated region
        $region29: #{tpu_custom_call.1} parent=11 // pred_check
          %p274 = pneg %p150
        $region30: #{tpu_custom_call.1} parent=11 // pred_check_branch
          %276 = sbr.rel (%p274) target = $region32
        $region31: #{tpu_custom_call.1} parent=11 // pred_region
          _
        $region32: #{tpu_custom_call.1} parent=11 // pred_fallthru
          _
        // Predicated region
        $region33: #{tpu_custom_call.1} parent=11 // pred_check
          %p277 = pneg %p171
        $region34: #{tpu_custom_call.1} parent=11 // pred_check_branch
          %279 = sbr.rel (%p277) target = $region36
        $region35: #{tpu_custom_call.1} parent=11 // pred_region
          _
        $region36: #{tpu_custom_call.1} parent=11 // pred_fallthru
          _
        // Predicated region
        $region37: #{tpu_custom_call.1} parent=11 // pred_check
          %p280 = pneg %p192
        $region38: #{tpu_custom_call.1} parent=11 // pred_check_branch
          %282 = sbr.rel (%p280) target = $region40
        $region39: #{tpu_custom_call.1} parent=11 // pred_region
          _
        $region40: #{tpu_custom_call.1} parent=11 // pred_fallthru
          _
        // Predicated region
        $region41: #{tpu_custom_call.1} parent=11 // pred_check
          %p283 = pneg %p213
        $region42: #{tpu_custom_call.1} parent=11 // pred_check_branch
          %285 = sbr.rel (%p283) target = $region44
        $region43: #{tpu_custom_call.1} parent=11 // pred_region
          _
        $region44: #{tpu_custom_call.1} parent=11 // pred_fallthru
          _
      $region12: #{tpu_custom_call.1} parent=5 // pred_fallthru
        _
      %p286 = scmp.lt.s32.totalorder %s19, 3
      // Predicated region
      $region45: #{tpu_custom_call.1} parent=5 // pred_check
        %p287 = pneg %p286
      $region46: #{tpu_custom_call.1} parent=5 // pred_check_branch
        %289 = sbr.rel (%p287) target = $region48
      $region47: #{tpu_custom_call.1} parent=5 // pred_region
        // Predicated region
        $region49: #{tpu_custom_call.1} parent=47 // pred_check
          %p290 = pneg %p39
        $region50: #{tpu_custom_call.1} parent=47 // pred_check_branch
          %292 = sbr.rel (%p290) target = $region52
        $region51: #{tpu_custom_call.1} parent=47 // pred_region
          %p293 = scmp.lt.s32.totalorder %s19, 2
          %s294 = scalar_select %p293, %s19, 2
          %s295 = smul.addr %s294, 8
          %s296 = scalar_lea.vmem %s0, %s295
        $region52: #{tpu_custom_call.1} parent=47 // pred_fallthru
          _
      $region48: #{tpu_custom_call.1} parent=5 // pred_fallthru
        _
      %p297 = scmp.le.s32.totalorder 1, %s19
      %p298 = scmp.lt.s32.totalorder %s19, 4
      %p299 = pnand %p297, %p298
      %p300 = pneg %p299
      // Predicated region
      $region53: #{tpu_custom_call.1} parent=5 // pred_check
        _
      $region54: #{tpu_custom_call.1} parent=5 // pred_check_branch
        %302 = sbr.rel (%p299) target = $region56
      $region55: #{tpu_custom_call.1} parent=5 // pred_region
        %s303 = ssub.s32 %s19, 1
        // Predicated region
        $region57: #{tpu_custom_call.1} parent=55 // pred_check
          %p304 = pneg %p66
        $region58: #{tpu_custom_call.1} parent=55 // pred_check_branch
          %306 = sbr.rel (%p304) target = $region60
        $region59: #{tpu_custom_call.1} parent=55 // pred_region
          %307 = dma.done [#allocation3], 64
        $region60: #{tpu_custom_call.1} parent=55 // pred_fallthru
          _
        %p308 = scmp.lt.s32.totalorder %s24, 2
        %s309 = scalar_select %p308, %s24, 2
        %s310 = smul.addr %s309, 8
        %s311 = scalar_lea.vmem %s0, %s310
        %p312 = pneg %p45
        %p313 = pneg %p42
        %p314 = pneg %p66
        %p315 = pneg %p63
        %p316 = pneg %p87
        %p317 = pneg %p84
        %p318 = pneg %p108
        %p319 = pneg %p105
        %p320 = pneg %p129
        %p321 = pneg %p126
        %p322 = pneg %p150
        %p323 = pneg %p147
        %p324 = pneg %p171
        %p325 = pneg %p168
        %p326 = pneg %p192
        %p327 = pneg %p189
        %p328 = pneg %p213
        %p329 = pneg %p210
        %p330 = pneg %p239
        %p331 = pneg %p236
        %s332 = sand.u32 %s226, 1
        %s333 = scalar_lea.sflag [#allocation4], %s332
        %s334 = sand.u32 %s226, 1
        %s335 = smul.addr %s334, 8
        %s336 = scalar_lea.vmem [#allocation5], %s335
        %p337 = scmp.lt.s32.totalorder %s24, 2
        %s338 = scalar_select %p337, %s24, 2
        %s339 = smul.addr %s338, 8
        %s340 = scalar_lea.vmem %s0, %s339
        %v341 = vld [vmem:[%s340] sm:$0xff]
        %v342 = vld [vmem:[#allocation2] sm:$0x7]
        %v343 = vld [vmem:[%s2] sm:$0x1]
        %v345 = vlaneseq
        %v346 = vshrl.u32 %v345, 7
        %v347 = vsub.s32 0, %v346
        %v348 = vrot.slane %v343, %v347
        %vm350 = vcmask 23552
        %v352 = vsel %vm350, %v341, 0
        %vm354 = vcmask 1042432
        %v356 = vsel %vm354, %v342, 0
        %358 = vmatprep.subr.mxu0 0.0
        %359 = vmatpush1.msra.mxu0 %v356
        %360 = vmatprep.subr.mxu0 0.0
        %361 = vmatpush1.msra.mxu0 0.0
        %362 = vmatprep.subr.mxu0 0.0
        %363 = vmatpush1.msra.mxu0 0.0
        %364 = vmatprep.subr.mxu0 0.0
        %365 = vmatpush1.msra.mxu0 0.0
        %366 = vmatprep.subr.mxu0 0.0
        %367 = vmatpush1.msra.mxu0 0.0
        %368 = vmatprep.subr.mxu0 0.0
        %369 = vmatpush1.msra.mxu0 0.0
        %370 = vmatprep.subr.mxu0 0.0
        %371 = vmatpush1.msra.mxu0 0.0
        %372 = vmatprep.subr.mxu0 0.0
        %373 = vmatpush1.msra.mxu0 0.0
        %374 = vmatprep.subr.mxu0 0.0
        %375 = vmatpush1.msra.mxu0 0.0
        %376 = vmatprep.subr.mxu0 0.0
        %377 = vmatpush1.msra.mxu0 0.0
        %378 = vmatprep.subr.mxu0 0.0
        %379 = vmatpush1.msra.mxu0 0.0
        %380 = vmatprep.subr.mxu0 0.0
        %381 = vmatpush1.msra.mxu0 0.0
        %382 = vmatprep.subr.mxu0 0.0
        %383 = vmatpush1.msra.mxu0 0.0
        %384 = vmatprep.subr.mxu0 0.0
        %385 = vmatpush1.msra.mxu0 0.0
        %386 = vmatprep.subr.mxu0 0.0
        %387 = vmatpush1.msra.mxu0 0.0
        %388 = vmatprep.subr.mxu0 0.0
        %389 = vmatpush1.msra.mxu0 0.0
        %390 = vmatprep.subr.mxu0 0.0
        %391 = vmatpush1.msra.mxu0 0.0
        %392 = vmatprep.subr.mxu0 0.0
        %393 = vmatpush1.msra.mxu0 0.0
        %394 = vmatprep.subr.mxu0 0.0
        %395 = vmatpush1.msra.mxu0 0.0
        %396 = vmatprep.subr.mxu0 0.0
        %397 = vmatpush1.msra.mxu0 0.0
        %398 = vmatprep.subr.mxu0 0.0
        %399 = vmatpush1.msra.mxu0 0.0
        %400 = vmatprep.subr.mxu0 0.0
        %401 = vmatpush1.msra.mxu0 0.0
        %402 = vmatprep.subr.mxu0 0.0
        %403 = vmatpush1.msra.mxu0 0.0
        %404 = vmatprep.subr.mxu0 0.0
        %405 = vmatpush1.msra.mxu0 0.0
        %406 = vmatprep.subr.mxu0 0.0
        %407 = vmatpush1.msra.mxu0 0.0
        %408 = vmatprep.subr.mxu0 0.0
        %409 = vmatpush1.msra.mxu0 0.0
        %410 = vmatprep.subr.mxu0 0.0
        %411 = vmatpush1.msra.mxu0 0.0
        %412 = vmatprep.subr.mxu0 0.0
        %413 = vmatpush1.msra.mxu0 0.0
        %414 = vmatprep.subr.mxu0 0.0
        %415 = vmatpush1.msra.mxu0 0.0
        %416 = vmatprep.subr.mxu0 0.0
        %417 = vmatpush1.msra.mxu0 0.0
        %418 = vmatprep.subr.mxu0 0.0
        %419 = vmatpush1.msra.mxu0 0.0
        %420 = vmatprep.subr.mxu0 0.0
        %421 = vmatpush1.msra.mxu0 0.0
        %422 = vmatprep.mubr.f32.mxu0 0.0
        %423 = vmatmul.mubr.f32.gmra.mrb[0].mxu0 %v352
        %v424 = vpop.f32.mrb[0].mxu0
        %v425 = vadd.f32 %v348, %v424
        %v426 = vpop.f32.mrb[0].mxu0
        %427 = vdwg.mxu0
        %v428 = vtanh.pop %v425
        %v429 = vld [vmem:[%s3] sm:$0xff]
        %v430 = vld [vmem:[%s3 + $0x8] sm:$0x3]
        %v431 = vld [vmem:[%s4] sm:$0x1]
        %v433 = vlaneseq
        %v434 = vshrl.u32 %v433, 7
        %v435 = vsub.s32 0, %v434
        %v436 = vrot.slane %v431, %v435
        %vm438 = vcmask 80896
        %v440 = vsel %vm438, %v428, 0
        %vm442 = vcmask 1041408
        %v444 = vsel %vm442, %v430, 0
        %446 = vmatprep.subr.mxu0 0.0
        %447 = vmatpush1.msra.mxu0 %v429
        %448 = vmatprep.subr.mxu0 0.0
        %449 = vmatpush1.msra.mxu0 %v444
        %450 = vmatprep.subr.mxu0 0.0
        %451 = vmatpush1.msra.mxu0 0.0
        %452 = vmatprep.subr.mxu0 0.0
        %453 = vmatpush1.msra.mxu0 0.0
        %454 = vmatprep.subr.mxu0 0.0
        %455 = vmatpush1.msra.mxu0 0.0
        %456 = vmatprep.subr.mxu0 0.0
        %457 = vmatpush1.msra.mxu0 0.0
        %458 = vmatprep.subr.mxu0 0.0
        %459 = vmatpush1.msra.mxu0 0.0
        %460 = vmatprep.subr.mxu0 0.0
        %461 = vmatpush1.msra.mxu0 0.0
        %462 = vmatprep.subr.mxu0 0.0
        %463 = vmatpush1.msra.mxu0 0.0
        %464 = vmatprep.subr.mxu0 0.0
        %465 = vmatpush1.msra.mxu0 0.0
        %466 = vmatprep.subr.mxu0 0.0
        %467 = vmatpush1.msra.mxu0 0.0
        %468 = vmatprep.subr.mxu0 0.0
        %469 = vmatpush1.msra.mxu0 0.0
        %470 = vmatprep.subr.mxu0 0.0
        %471 = vmatpush1.msra.mxu0 0.0
        %472 = vmatprep.subr.mxu0 0.0
        %473 = vmatpush1.msra.mxu0 0.0
        %474 = vmatprep.subr.mxu0 0.0
        %475 = vmatpush1.msra.mxu0 0.0
        %476 = vmatprep.subr.mxu0 0.0
        %477 = vmatpush1.msra.mxu0 0.0
        %478 = vmatprep.subr.mxu0 0.0
        %479 = vmatpush1.msra.mxu0 0.0
        %480 = vmatprep.subr.mxu0 0.0
        %481 = vmatpush1.msra.mxu0 0.0
        %482 = vmatprep.subr.mxu0 0.0
        %483 = vmatpush1.msra.mxu0 0.0
        %484 = vmatprep.subr.mxu0 0.0
        %485 = vmatpush1.msra.mxu0 0.0
        %486 = vmatprep.subr.mxu0 0.0
        %487 = vmatpush1.msra.mxu0 0.0
        %488 = vmatprep.subr.mxu0 0.0
        %489 = vmatpush1.msra.mxu0 0.0
        %490 = vmatprep.subr.mxu0 0.0
        %491 = vmatpush1.msra.mxu0 0.0
        %492 = vmatprep.subr.mxu0 0.0
        %493 = vmatpush1.msra.mxu0 0.0
        %494 = vmatprep.subr.mxu0 0.0
        %495 = vmatpush1.msra.mxu0 0.0
        %496 = vmatprep.subr.mxu0 0.0
        %497 = vmatpush1.msra.mxu0 0.0
        %498 = vmatprep.subr.mxu0 0.0
        %499 = vmatpush1.msra.mxu0 0.0
        %500 = vmatprep.subr.mxu0 0.0
        %501 = vmatpush1.msra.mxu0 0.0
        %502 = vmatprep.subr.mxu0 0.0
        %503 = vmatpush1.msra.mxu0 0.0
        %504 = vmatprep.subr.mxu0 0.0
        %505 = vmatpush1.msra.mxu0 0.0
        %506 = vmatprep.subr.mxu0 0.0
        %507 = vmatpush1.msra.mxu0 0.0
        %508 = vmatprep.subr.mxu0 0.0
        %509 = vmatpush1.msra.mxu0 0.0
        %510 = vmatprep.mubr.f32.mxu0 0.0
        %511 = vmatmul.mubr.f32.gmra.mrb[0].mxu0 %v440
        %v512 = vpop.f32.mrb[0].mxu0
        %v513 = vadd.f32 %v436, %v512
        %v514 = vpop.f32.mrb[0].mxu0
        %515 = vdwg.mxu0
        %v516 = vtanh.pop %v513
        %v517 = vld [vmem:[%s5] sm:$0xff]
        %v518 = vld [vmem:[%s5 + $0x8] sm:$0x3]
        %v519 = vld [vmem:[%s6] sm:$0x1]
        %v521 = vlaneseq
        %v522 = vshrl.u32 %v521, 7
        %v523 = vsub.s32 0, %v522
        %v524 = vrot.slane %v519, %v523
        %v527 = vsel %vm438, %v516, 0
        %v530 = vsel %vm442, %v518, 0
        %532 = vmatprep.subr.mxu0 0.0
        %533 = vmatpush1.msra.mxu0 %v517
        %534 = vmatprep.subr.mxu0 0.0
        %535 = vmatpush1.msra.mxu0 %v530
        %536 = vmatprep.subr.mxu0 0.0
        %537 = vmatpush1.msra.mxu0 0.0
        %538 = vmatprep.subr.mxu0 0.0
        %539 = vmatpush1.msra.mxu0 0.0
        %540 = vmatprep.subr.mxu0 0.0
        %541 = vmatpush1.msra.mxu0 0.0
        %542 = vmatprep.subr.mxu0 0.0
        %543 = vmatpush1.msra.mxu0 0.0
        %544 = vmatprep.subr.mxu0 0.0
        %545 = vmatpush1.msra.mxu0 0.0
        %546 = vmatprep.subr.mxu0 0.0
        %547 = vmatpush1.msra.mxu0 0.0
        %548 = vmatprep.subr.mxu0 0.0
        %549 = vmatpush1.msra.mxu0 0.0
        %550 = vmatprep.subr.mxu0 0.0
        %551 = vmatpush1.msra.mxu0 0.0
        %552 = vmatprep.subr.mxu0 0.0
        %553 = vmatpush1.msra.mxu0 0.0
        %554 = vmatprep.subr.mxu0 0.0
        %555 = vmatpush1.msra.mxu0 0.0
        %556 = vmatprep.subr.mxu0 0.0
        %557 = vmatpush1.msra.mxu0 0.0
        %558 = vmatprep.subr.mxu0 0.0
        %559 = vmatpush1.msra.mxu0 0.0
        %560 = vmatprep.subr.mxu0 0.0
        %561 = vmatpush1.msra.mxu0 0.0
        %562 = vmatprep.subr.mxu0 0.0
        %563 = vmatpush1.msra.mxu0 0.0
        %564 = vmatprep.subr.mxu0 0.0
        %565 = vmatpush1.msra.mxu0 0.0
        %566 = vmatprep.subr.mxu0 0.0
        %567 = vmatpush1.msra.mxu0 0.0
        %568 = vmatprep.subr.mxu0 0.0
        %569 = vmatpush1.msra.mxu0 0.0
        %570 = vmatprep.subr.mxu0 0.0
        %571 = vmatpush1.msra.mxu0 0.0
        %572 = vmatprep.subr.mxu0 0.0
        %573 = vmatpush1.msra.mxu0 0.0
        %574 = vmatprep.subr.mxu0 0.0
        %575 = vmatpush1.msra.mxu0 0.0
        %576 = vmatprep.subr.mxu0 0.0
        %577 = vmatpush1.msra.mxu0 0.0
        %578 = vmatprep.subr.mxu0 0.0
        %579 = vmatpush1.msra.mxu0 0.0
        %580 = vmatprep.subr.mxu0 0.0
        %581 = vmatpush1.msra.mxu0 0.0
        %582 = vmatprep.subr.mxu0 0.0
        %583 = vmatpush1.msra.mxu0 0.0
        %584 = vmatprep.subr.mxu0 0.0
        %585 = vmatpush1.msra.mxu0 0.0
        %586 = vmatprep.subr.mxu0 0.0
        %587 = vmatpush1.msra.mxu0 0.0
        %588 = vmatprep.subr.mxu0 0.0
        %589 = vmatpush1.msra.mxu0 0.0
        %590 = vmatprep.subr.mxu0 0.0
        %591 = vmatpush1.msra.mxu0 0.0
        %592 = vmatprep.subr.mxu0 0.0
        %593 = vmatpush1.msra.mxu0 0.0
        %594 = vmatprep.subr.mxu0 0.0
        %595 = vmatpush1.msra.mxu0 0.0
        %596 = vmatprep.mubr.f32.mxu0 0.0
        %597 = vmatmul.mubr.f32.gmra.mrb[0].mxu0 %v527
        %v598 = vpop.f32.mrb[0].mxu0
        %v599 = vadd.f32 %v524, %v598
        %v600 = vpop.f32.mrb[0].mxu0
        %601 = vdwg.mxu0
        %v602 = vld [vmem:[%s7] sm:$0x1]
        %vm603 = vcmp.gt.f32.partialorder %v602, 0.5
        %v604 = vld [vmem:[%s8] sm:$0x1]
        %vm605 = vcmp.gt.f32.partialorder %v604, 0.5
        %v606 = vmul.f32 %v599, 1.442695
        %v607 = vpow.pop %v606
        %v608 = vsel %vm603, 1, 0
        %v609 = vlaneseq
        %v610 = vshrl.u32 %v609, 7
        %v611 = vsub.s32 0, %v610
        %v612 = vrot.slane %v608, %v611
        %vm613 = vcmp.eq.s32.totalorder %v612, 1
        %v614 = vsel %vm613, %v607, %v599
        %v615 = vsel %vm605, 1, 0
        %v616 = vlaneseq
        %v617 = vshrl.u32 %v616, 7
        %v618 = vsub.s32 0, %v617
        %v619 = vrot.slane %v615, %v618
        %vm620 = vcmp.eq.s32.totalorder %v619, 1
        %v621 = vsel %vm620, %v599, -1e+30
        %622 = vmax.xlane.f32.xlu0 %v621
        %v623 = vpop.xlane.xlu0 %622
        %v624 = vsub.f32 %v621, %v623
        %v625 = vmul.f32 %v624, 1.442695
        %v626 = vpow.pop %v625
        %v627 = vsel %vm620, %v626, 0.0
        %628 = vadd.xlane.f32.xlu0 %v627
        %v629 = vpop.xlane.xlu0 %628
        %v630 = vrcp.pop %v629
        %v631 = vmul.f32 %v627, %v630
        %v632 = vsel %vm620, %v631, %v614
        %633 = vst [vmem:[%s336] sm:$0xff] %v632
        %s634 = sand.u32 %s226, 1
        %s635 = scalar_lea.sflag [#allocation4], %s634
        %s636 = sand.u32 %s226, 1
        %s637 = smul.addr %s636, 8
        %s638 = scalar_lea.vmem [#allocation5], %s637
        // Predicated region
        $region61: #{tpu_custom_call.1} parent=55 // pred_check
          %p639 = pneg %p236
        $region62: #{tpu_custom_call.1} parent=55 // pred_check_branch
          %641 = sbr.rel (%p639) target = $region64
        $region63: #{tpu_custom_call.1} parent=55 // pred_region
          %s643 = ssub.s32 128, 128
          %644 = vsyncadd %s635, %s643
          %s645 = smul.addr %s24, 128
          %s646 = scalar_lea.hbm %s9, %s645
          %s648 = sshll.u32 %s638, 4
          %s649 = int_to_ptr.vmem [resolvable:$true] %s648
          %651 = dma.vmem_to_hbm [thread:$0]  %s649, 128, %s646, %s635
        $region64: #{tpu_custom_call.1} parent=55 // pred_fallthru
          _
      $region56: #{tpu_custom_call.1} parent=5 // pred_fallthru
        _
      %p652 = scmp.le.s32.totalorder 2, %s19
      // Predicated region
      $region65: #{tpu_custom_call.1} parent=5 // pred_check
        %p653 = pneg %p652
      $region66: #{tpu_custom_call.1} parent=5 // pred_check_branch
        %655 = sbr.rel (%p653) target = $region68
      $region67: #{tpu_custom_call.1} parent=5 // pred_region
        %s656 = ssub.s32 %s19, 2
        // Predicated region
        $region69: #{tpu_custom_call.1} parent=67 // pred_check
          %p657 = pneg %p242
        $region70: #{tpu_custom_call.1} parent=67 // pred_check_branch
          %659 = sbr.rel (%p657) target = $region72
        $region71: #{tpu_custom_call.1} parent=67 // pred_region
          %s660 = sand.u32 %s227, 1
          %s661 = scalar_lea.sflag [#allocation4], %s660
          %s662 = sand.u32 %s227, 1
          %s663 = smul.addr %s662, 8
          %s664 = scalar_lea.vmem [#allocation5], %s663
          %665 = dma.done %s661, 128
        $region72: #{tpu_custom_call.1} parent=67 // pred_fallthru
          _
      $region68: #{tpu_custom_call.1} parent=5 // pred_fallthru
        _
    $region6: #{tpu_custom_call.1} parent=1 // loop_footer
      %s23 = sadd.s32 1, %s19
    $region7: #{tpu_custom_call.1} parent=1 // loop_footer_branch
      %18 = sbr.rel target = $region3
    $region8: #{tpu_custom_call.1} parent=1 // loop_exit
      _
    %666 = vsyncpa [#allocation3], 1
    %s667 = scalar_lea.sflag [#allocation3], 1
    %668 = vsyncpa %s667, 1
    %669 = vsyncpa [#allocation4], 1
    %s670 = scalar_lea.sflag [#allocation4], 1
    %671 = vsyncpa %s670, 1

</llo_original>
